<compile_context>
chip_gen: v5e
topology: v5e:2x2
jax: 0.10.0
libtpu: 0.0.40
codegen_flags: <defaults>
</compile_context>

<pallas_src>
import functools
import math

import jax
import jax.numpy as jnp
from jax import lax
from jax.experimental import pallas as pl
from jax.experimental.pallas import tpu as pltpu

BATCH = 2
N_VOCAB = 100
N_EMBED = 32
N_TOKEN = 8
N_HEADS = 4
N_LAYERS = 2
HEAD_DIM = N_EMBED // N_HEADS
LN_EPS = 1e-5                       # PyTorch nn.LayerNorm default eps
BATCH_BLOCK = 2                     # sequences per grid step (fatten MXU M dim)
VMEM_LIMIT_BYTES = 48 * 1024 * 1024  # explicit, with headroom on v7x's 64 MiB


# ---------------------------------------------------------------------------
# Kernel helpers
# ---------------------------------------------------------------------------
def _layernorm(x, gamma, beta):
    # f32 math (no bf16 VPU on v5e; precision matters here anyway)
    mu = jnp.mean(x, axis=-1, keepdims=True)
    var = jnp.mean((x - mu) ** 2, axis=-1, keepdims=True)
    return (x - mu) * lax.rsqrt(var + LN_EPS) * gamma + beta


def _bf16_dot(a_f32, w_bf16):
    # bf16 MXU operands, f32 accumulation
    return jnp.dot(a_f32.astype(jnp.bfloat16), w_bf16,
                   preferred_element_type=jnp.float32)


# ---------------------------------------------------------------------------
# Fused transformer-block kernel (LN1 + causal MHA + LN2 + quickGELU MLP,
# optionally + final LayerNorm for the last layer)
# ---------------------------------------------------------------------------
def clip_layer_kernel(x_ref,
                      ln1_g_ref, ln1_b_ref,
                      wqkv_ref, bqkv_ref, wo_ref, bo_ref,
                      ln2_g_ref, ln2_b_ref,
                      w1_ref, b1_ref, w2_ref, b2_ref,
                      fin_g_ref, fin_b_ref,
                      out_ref, *, apply_final_ln):
    x = x_ref[...]                                   # (BB, T, D) f32
    BB, T, D = x.shape
    x2 = x.reshape(BB * T, D)                        # fatten M for projections

    # --- LayerNorm 1 + causal multi-head self-attention --------------------
    h = _layernorm(x2, ln1_g_ref[...], ln1_b_ref[...])
    qkv = _bf16_dot(h, wqkv_ref[...]) + bqkv_ref[...]          # (BB*T, 3D) f32

    scale = 1.0 / math.sqrt(HEAD_DIM)
    q = (qkv[:, 0 * D:1 * D] * scale).astype(jnp.bfloat16).reshape(BB, T, D)
    k = qkv[:, 1 * D:2 * D].astype(jnp.bfloat16).reshape(BB, T, D)
    v = qkv[:, 2 * D:3 * D].astype(jnp.bfloat16).reshape(BB, T, D)

    row = lax.broadcasted_iota(jnp.int32, (T, T), 0)
    col = lax.broadcasted_iota(jnp.int32, (T, T), 1)
    causal = col > row                               # True above diagonal

    head_outs = []
    for hd in range(N_HEADS):                        # static unroll over heads
        sl = slice(hd * HEAD_DIM, (hd + 1) * HEAD_DIM)
        qh, kh, vh = q[:, :, sl], k[:, :, sl], v[:, :, sl]
        s = jnp.einsum('btd,bsd->bts', qh, kh,
                       preferred_element_type=jnp.float32)     # (BB, T, T) f32
        s = jnp.where(causal, -1e30, s)
        s = s - jnp.max(s, axis=-1, keepdims=True)
        p = jnp.exp(s)
        p = p * pl.reciprocal(jnp.sum(p, axis=-1, keepdims=True), approx=True)
        oh = jnp.einsum('bts,bsd->btd', p.astype(jnp.bfloat16), vh,
                        preferred_element_type=jnp.float32)     # (BB, T, Dh)
        head_outs.append(oh)

    # single concatenated-heads output projection: (BB*T, D) x (D, D)
    attn = jnp.concatenate(head_outs, axis=-1).reshape(BB * T, D)
    x2 = x2 + _bf16_dot(attn, wo_ref[...]) + bo_ref[...]        # residual 1

    # --- LayerNorm 2 + MLP with quick-GELU ---------------------------------
    h = _layernorm(x2, ln2_g_ref[...], ln2_b_ref[...])
    h = _bf16_dot(h, w1_ref[...]) + b1_ref[...]
    h = h * jax.nn.sigmoid(1.702 * h)                           # f32 elementwise
    h = _bf16_dot(h, w2_ref[...]) + b2_ref[...]
    x2 = x2 + h                                                 # residual 2

    if apply_final_ln:                                          # fused last LN
        x2 = _layernorm(x2, fin_g_ref[...], fin_b_ref[...])

    out_ref[...] = x2.reshape(BB, T, D)


# ---------------------------------------------------------------------------
# Wrappers (pallas_call plumbing)
# ---------------------------------------------------------------------------
def _full_spec(shape):
    nd = len(shape)
    return pl.BlockSpec(shape, lambda b, _nd=nd: (0,) * _nd)


def run_layer(x, layer_params, fin_g, fin_b, *, apply_final_ln):
    B, T, D = x.shape
    bb = min(BATCH_BLOCK, B)
    assert B % bb == 0, "batch must be divisible by BATCH_BLOCK"

    extras = list(layer_params) + [fin_g, fin_b]
    batch_spec = pl.BlockSpec((bb, T, D), lambda b: (b, 0, 0))
    in_specs = [batch_spec] + [_full_spec(p.shape) for p in extras]
    kernel = functools.partial(clip_layer_kernel, apply_final_ln=apply_final_ln)

    return pl.pallas_call(
        kernel,
        out_shape=jax.ShapeDtypeStruct((B, T, D), jnp.float32),
        grid=(B // bb,),
        in_specs=in_specs,
        out_specs=batch_spec,
        compiler_params=pltpu.CompilerParams(
            dimension_semantics=("parallel",),
            vmem_limit_bytes=VMEM_LIMIT_BYTES),
    )(x, *extras)


def clip_forward(tokens, params):
    # Token-embedding gather + positional add: pure gather glue, left to XLA
    # (a separate Pallas call here would only add an extra HBM round-trip).
    x = jnp.take(params["tok_table"], tokens.astype(jnp.int32), axis=0) \
        + params["pos_emb"]
    n = len(params["layers"])
    for i, layer in enumerate(params["layers"]):
        x = run_layer(x, layer, params["final_ln_g"], params["final_ln_b"],
                      apply_final_ln=(i == n - 1))
    return x


# ---------------------------------------------------------------------------
# Deterministic parameter init (synthetic; shapes follow the module)
# ---------------------------------------------------------------------------
def init_clip_params(key):
    keys = iter(jax.random.split(key, 8 + 8 * N_LAYERS))

    def nrm(shape, scale=0.02, dtype=jnp.float32):
        return (scale * jax.random.normal(next(keys), shape, jnp.float32)).astype(dtype)

    params = {
        "tok_table": nrm((N_VOCAB, N_EMBED)),
        "pos_emb": nrm((N_TOKEN, N_EMBED)),   # module inits zeros; random keeps add non-trivial
        "final_ln_g": jnp.ones((1, N_EMBED), jnp.float32),
        "final_ln_b": jnp.zeros((1, N_EMBED), jnp.float32),
        "layers": [],
    }
    for _ in range(N_LAYERS):
        params["layers"].append([
            jnp.ones((1, N_EMBED), jnp.float32),                   # ln1 gamma
            jnp.zeros((1, N_EMBED), jnp.float32),                  # ln1 beta
            nrm((N_EMBED, 3 * N_EMBED), dtype=jnp.bfloat16),       # W_qkv (in_proj)
            jnp.zeros((1, 3 * N_EMBED), jnp.float32),              # b_qkv
            nrm((N_EMBED, N_EMBED), dtype=jnp.bfloat16),           # W_out (out_proj)
            jnp.zeros((1, N_EMBED), jnp.float32),                  # b_out
            jnp.ones((1, N_EMBED), jnp.float32),                   # ln2 gamma
            jnp.zeros((1, N_EMBED), jnp.float32),                  # ln2 beta
            nrm((N_EMBED, 4 * N_EMBED), dtype=jnp.bfloat16),       # linear1 W
            jnp.zeros((1, 4 * N_EMBED), jnp.float32),              # linear1 b
            nrm((4 * N_EMBED, N_EMBED), dtype=jnp.bfloat16),       # linear2 W
            jnp.zeros((1, N_EMBED), jnp.float32),                  # linear2 b
        ])
    return params


# ---------------------------------------------------------------------------
# Pure-JAX reference at matched precision (bf16 MXU operands, f32 accumulate)
# ---------------------------------------------------------------------------
def clip_reference(tokens, params):
    def ln(x, g, b):
        mu = x.mean(-1, keepdims=True)
        var = ((x - mu) ** 2).mean(-1, keepdims=True)
        return (x - mu) / jnp.sqrt(var + LN_EPS) * g + b

    def bdot(a, w):
        return jnp.dot(a.astype(jnp.bfloat16), w, preferred_element_type=jnp.float32)

    x = jnp.take(params["tok_table"], tokens.astype(jnp.int32), axis=0) \
        + params["pos_emb"]
    for (g1, be1, wqkv, bqkv, wo, bo, g2, be2, w1, bm1, w2, bm2) in params["layers"]:
        B, T, D = x.shape
        h = ln(x, g1, be1)
        qkv = bdot(h.reshape(B * T, D), wqkv).reshape(B, T, 3 * D) + bqkv
        q, k, v = jnp.split(qkv, 3, axis=-1)
        q = q / math.sqrt(HEAD_DIM)
        qh = q.reshape(B, T, N_HEADS, HEAD_DIM).transpose(0, 2, 1, 3).astype(jnp.bfloat16)
        kh = k.reshape(B, T, N_HEADS, HEAD_DIM).transpose(0, 2, 1, 3).astype(jnp.bfloat16)
        vh = v.reshape(B, T, N_HEADS, HEAD_DIM).transpose(0, 2, 1, 3).astype(jnp.bfloat16)
        s = jnp.einsum("bhtd,bhsd->bhts", qh, kh, preferred_element_type=jnp.float32)
        mask = jnp.triu(jnp.ones((T, T), bool), 1)
        s = jnp.where(mask, -1e30, s)
        p = jax.nn.softmax(s, axis=-1)
        o = jnp.einsum("bhts,bhsd->bhtd", p.astype(jnp.bfloat16), vh,
                       preferred_element_type=jnp.float32)
        o = o.transpose(0, 2, 1, 3).reshape(B, T, D)
        x = x + (bdot(o.reshape(B * T, D), wo).reshape(B, T, D) + bo)
        h = ln(x, g2, be2)
        h2 = bdot(h.reshape(B * T, D), w1).reshape(B, T, 4 * D) + bm1
        h2 = h2 * jax.nn.sigmoid(1.702 * h2)
        h2 = bdot(h2.reshape(B * T, 4 * D), w2).reshape(B, T, D) + bm2
        x = x + h2
    return ln(x, params["final_ln_g"], params["final_ln_b"])


# ---------------------------------------------------------------------------
if __name__ == "__main__":
    key = jax.random.PRNGKey(0)
    pkey, tkey = jax.random.split(key)
    params = init_clip_params(pkey)
    tokens = jax.random.randint(tkey, (BATCH, N_TOKEN), 0, N_VOCAB, dtype=jnp.int32)

    out = jax.block_until_ready(clip_forward(tokens, params))
    assert out.shape == (BATCH, N_TOKEN, N_EMBED)

    ref = clip_reference(tokens, params)
    max_err = float(jnp.max(jnp.abs(out - ref)))
    # tolerance covers the approx EUP reciprocal in the kernel softmax;
    # all matmul precision (bf16 operands / f32 accum) is matched in the ref.
    if max_err < 2e-2:
        print("KERNEL_OK")
    else:
        print(f"MISMATCH max_abs_err={max_err}")
</pallas_src>

<mosaic_0001>
module attributes {stable_mosaic.version = 11 : i64} {
  func.func @clip_layer_kernel(%arg0: i32, %arg1: memref<2x8x32xf32, #tpu.memory_space<vmem>>, %arg2: memref<1x32xf32, #tpu.memory_space<vmem>>, %arg3: memref<1x32xf32, #tpu.memory_space<vmem>>, %arg4: memref<32x96xbf16, #tpu.memory_space<vmem>>, %arg5: memref<1x96xf32, #tpu.memory_space<vmem>>, %arg6: memref<32x32xbf16, #tpu.memory_space<vmem>>, %arg7: memref<1x32xf32, #tpu.memory_space<vmem>>, %arg8: memref<1x32xf32, #tpu.memory_space<vmem>>, %arg9: memref<1x32xf32, #tpu.memory_space<vmem>>, %arg10: memref<32x128xbf16, #tpu.memory_space<vmem>>, %arg11: memref<1x128xf32, #tpu.memory_space<vmem>>, %arg12: memref<128x32xbf16, #tpu.memory_space<vmem>>, %arg13: memref<1x32xf32, #tpu.memory_space<vmem>>, %arg14: memref<1x32xf32, #tpu.memory_space<vmem>>, %arg15: memref<1x32xf32, #tpu.memory_space<vmem>>, %arg16: memref<2x8x32xf32, #tpu.memory_space<vmem>>) attributes {dimension_semantics = [#tpu.dimension_semantics<parallel>], iteration_bounds = array<i64: 1>, scalar_prefetch = 0 : i64, scratch_operands = 0 : i64, tpu.core_type = #tpu.core_type<tc>, window_params = [{transform_indices = @transform_0, window_bounds = array<i64: 2, 8, 32>}, {pipeline_mode = #tpu.pipeline_mode<synchronous>, transform_indices = @transform_1, window_bounds = array<i64: 1, 32>}, {pipeline_mode = #tpu.pipeline_mode<synchronous>, transform_indices = @transform_2, window_bounds = array<i64: 1, 32>}, {pipeline_mode = #tpu.pipeline_mode<synchronous>, transform_indices = @transform_3, window_bounds = array<i64: 32, 96>}, {pipeline_mode = #tpu.pipeline_mode<synchronous>, transform_indices = @transform_4, window_bounds = array<i64: 1, 96>}, {pipeline_mode = #tpu.pipeline_mode<synchronous>, transform_indices = @transform_5, window_bounds = array<i64: 32, 32>}, {pipeline_mode = #tpu.pipeline_mode<synchronous>, transform_indices = @transform_6, window_bounds = array<i64: 1, 32>}, {pipeline_mode = #tpu.pipeline_mode<synchronous>, transform_indices = @transform_7, window_bounds = array<i64: 1, 32>}, {pipeline_mode = #tpu.pipeline_mode<synchronous>, transform_indices = @transform_8, window_bounds = array<i64: 1, 32>}, {pipeline_mode = #tpu.pipeline_mode<synchronous>, transform_indices = @transform_9, window_bounds = array<i64: 32, 128>}, {pipeline_mode = #tpu.pipeline_mode<synchronous>, transform_indices = @transform_10, window_bounds = array<i64: 1, 128>}, {pipeline_mode = #tpu.pipeline_mode<synchronous>, transform_indices = @transform_11, window_bounds = array<i64: 128, 32>}, {pipeline_mode = #tpu.pipeline_mode<synchronous>, transform_indices = @transform_12, window_bounds = array<i64: 1, 32>}, {pipeline_mode = #tpu.pipeline_mode<synchronous>, transform_indices = @transform_13, window_bounds = array<i64: 1, 32>}, {pipeline_mode = #tpu.pipeline_mode<synchronous>, transform_indices = @transform_14, window_bounds = array<i64: 1, 32>}, {transform_indices = @transform_15, window_bounds = array<i64: 2, 8, 32>}]} {
    %c0 = arith.constant 0 : index
    %c0_0 = arith.constant 0 : index
    %c0_1 = arith.constant 0 : index
    %0 = vector.load %arg1[%c0, %c0_0, %c0_1] : memref<2x8x32xf32, #tpu.memory_space<vmem>>, vector<2x8x32xf32>
    %1 = vector.shape_cast %0 : vector<2x8x32xf32> to vector<16x32xf32>
    %c0_2 = arith.constant 0 : index
    %c0_3 = arith.constant 0 : index
    %2 = vector.load %arg2[%c0_2, %c0_3] : memref<1x32xf32, #tpu.memory_space<vmem>>, vector<1x32xf32>
    %c0_4 = arith.constant 0 : index
    %c0_5 = arith.constant 0 : index
    %3 = vector.load %arg3[%c0_4, %c0_5] : memref<1x32xf32, #tpu.memory_space<vmem>>, vector<1x32xf32>
    %cst = arith.constant dense<0.000000e+00> : vector<16xf32>
    %4 = vector.multi_reduction <add>, %1, %cst [1] : vector<16x32xf32> to vector<16xf32>
    %5 = vector.shape_cast %4 : vector<16xf32> to vector<16x1xf32>
    %cst_6 = arith.constant 3.200000e+01 : f32
    %6 = vector.broadcast %cst_6 : f32 to vector<16x1xf32>
    %7 = arith.divf %5, %6 : vector<16x1xf32>
    %8 = vector.broadcast %7 : vector<16x1xf32> to vector<16x32xf32>
    %9 = arith.subf %1, %8 : vector<16x32xf32>
    %10 = arith.mulf %9, %9 : vector<16x32xf32>
    %cst_7 = arith.constant dense<0.000000e+00> : vector<16xf32>
    %11 = vector.multi_reduction <add>, %10, %cst_7 [1] : vector<16x32xf32> to vector<16xf32>
    %12 = vector.shape_cast %11 : vector<16xf32> to vector<16x1xf32>
    %cst_8 = arith.constant 3.200000e+01 : f32
    %13 = vector.broadcast %cst_8 : f32 to vector<16x1xf32>
    %14 = arith.divf %12, %13 : vector<16x1xf32>
    %15 = vector.broadcast %7 : vector<16x1xf32> to vector<16x32xf32>
    %16 = arith.subf %1, %15 : vector<16x32xf32>
    %cst_9 = arith.constant 9.99999974E-6 : f32
    %17 = vector.broadcast %cst_9 : f32 to vector<16x1xf32>
    %18 = arith.addf %14, %17 : vector<16x1xf32>
    %19 = math.rsqrt %18 : vector<16x1xf32>
    %20 = vector.broadcast %19 : vector<16x1xf32> to vector<16x32xf32>
    %21 = arith.mulf %16, %20 : vector<16x32xf32>
    %22 = vector.broadcast %2 : vector<1x32xf32> to vector<16x32xf32>
    %23 = arith.mulf %21, %22 : vector<16x32xf32>
    %24 = vector.broadcast %3 : vector<1x32xf32> to vector<16x32xf32>
    %25 = arith.addf %23, %24 : vector<16x32xf32>
    %c0_10 = arith.constant 0 : index
    %c0_11 = arith.constant 0 : index
    %26 = vector.load %arg4[%c0_10, %c0_11] : memref<32x96xbf16, #tpu.memory_space<vmem>>, vector<32x96xbf16>
    %27 = arith.truncf %25 : vector<16x32xf32> to vector<16x32xbf16>
    %cst_12 = arith.constant dense<0.000000e+00> : vector<16x96xf32>
    %28 = tpu.matmul %27, %26, %cst_12 {dimension_numbers = #tpu.dot_dimension_numbers<[1], [0], [0], [1], [0, 0, 1, 1], [], []>} : vector<16x32xbf16>, vector<32x96xbf16>, vector<16x96xf32> -> vector<16x96xf32>
    %c0_13 = arith.constant 0 : index
    %c0_14 = arith.constant 0 : index
    %29 = vector.load %arg5[%c0_13, %c0_14] : memref<1x96xf32, #tpu.memory_space<vmem>>, vector<1x96xf32>
    %30 = vector.broadcast %29 : vector<1x96xf32> to vector<16x96xf32>
    %31 = arith.addf %28, %30 : vector<16x96xf32>
    %32 = vector.extract_strided_slice %31 {offsets = [0, 0], sizes = [16, 32], strides = [1, 1]} : vector<16x96xf32> to vector<16x32xf32>
    %cst_15 = arith.constant 0.353553385 : f32
    %33 = vector.broadcast %cst_15 : f32 to vector<16x32xf32>
    %34 = arith.mulf %32, %33 : vector<16x32xf32>
    %35 = arith.truncf %34 : vector<16x32xf32> to vector<16x32xbf16>
    %36 = vector.shape_cast %35 : vector<16x32xbf16> to vector<2x8x32xbf16>
    %37 = vector.extract_strided_slice %31 {offsets = [0, 32], sizes = [16, 32], strides = [1, 1]} : vector<16x96xf32> to vector<16x32xf32>
    %38 = arith.truncf %37 : vector<16x32xf32> to vector<16x32xbf16>
    %39 = vector.shape_cast %38 : vector<16x32xbf16> to vector<2x8x32xbf16>
    %40 = vector.extract_strided_slice %31 {offsets = [0, 64], sizes = [16, 32], strides = [1, 1]} : vector<16x96xf32> to vector<16x32xf32>
    %41 = arith.truncf %40 : vector<16x32xf32> to vector<16x32xbf16>
    %42 = vector.shape_cast %41 : vector<16x32xbf16> to vector<2x8x32xbf16>
    %43 = tpu.iota {dimensions = array<i32: 0>} : vector<8x8xi32>
    %44 = tpu.iota {dimensions = array<i32: 1>} : vector<8x8xi32>
    %45 = arith.cmpi sgt, %44, %43 : vector<8x8xi32>
    %46 = vector.extract_strided_slice %36 {offsets = [0, 0, 0], sizes = [2, 8, 8], strides = [1, 1, 1]} : vector<2x8x32xbf16> to vector<2x8x8xbf16>
    %47 = vector.extract_strided_slice %39 {offsets = [0, 0, 0], sizes = [2, 8, 8], strides = [1, 1, 1]} : vector<2x8x32xbf16> to vector<2x8x8xbf16>
    %48 = vector.extract_strided_slice %42 {offsets = [0, 0, 0], sizes = [2, 8, 8], strides = [1, 1, 1]} : vector<2x8x32xbf16> to vector<2x8x8xbf16>
    "tpu.trace_start"() <{level = 10 : i32, message = "btd,bsd->bts"}> : () -> ()
    %cst_16 = arith.constant dense<0.000000e+00> : vector<2x8x8xf32>
    %49 = tpu.matmul %46, %47, %cst_16 {dimension_numbers = #tpu.dot_dimension_numbers<[2], [2], [1], [1], [0, 0, 0, 1, 1, 1], [0], [0]>} : vector<2x8x8xbf16>, vector<2x8x8xbf16>, vector<2x8x8xf32> -> vector<2x8x8xf32>
    %cst_17 = arith.constant -1.000000e+30 : f32
    "tpu.trace_stop"() : () -> ()
    %50 = vector.shape_cast %45 : vector<8x8xi1> to vector<1x8x8xi1>
    %51 = vector.broadcast %50 : vector<1x8x8xi1> to vector<2x8x8xi1>
    %52 = vector.broadcast %cst_17 : f32 to vector<2x8x8xf32>
    %53 = arith.select %51, %52, %49 : vector<2x8x8xi1>, vector<2x8x8xf32>
    %cst_18 = arith.constant dense<0xFF800000> : vector<2x8xf32>
    %54 = vector.multi_reduction <maximumf>, %53, %cst_18 [2] : vector<2x8x8xf32> to vector<2x8xf32>
    %55 = vector.shape_cast %54 : vector<2x8xf32> to vector<2x8x1xf32>
    %56 = vector.broadcast %55 : vector<2x8x1xf32> to vector<2x8x8xf32>
    %57 = arith.subf %53, %56 : vector<2x8x8xf32>
    %58 = math.exp %57 : vector<2x8x8xf32>
    %cst_19 = arith.constant dense<0.000000e+00> : vector<2x8xf32>
    %59 = vector.multi_reduction <add>, %58, %cst_19 [2] : vector<2x8x8xf32> to vector<2x8xf32>
    %60 = vector.shape_cast %59 : vector<2x8xf32> to vector<2x8x1xf32>
    %61 = tpu.reciprocal %60 {approx = true} : vector<2x8x1xf32> -> vector<2x8x1xf32>
    %62 = vector.broadcast %61 : vector<2x8x1xf32> to vector<2x8x8xf32>
    %63 = arith.mulf %58, %62 : vector<2x8x8xf32>
    %64 = arith.truncf %63 : vector<2x8x8xf32> to vector<2x8x8xbf16>
    "tpu.trace_start"() <{level = 10 : i32, message = "bts,bsd->btd"}> : () -> ()
    %cst_20 = arith.constant dense<0.000000e+00> : vector<2x8x8xf32>
    %65 = tpu.matmul %64, %48, %cst_20 {dimension_numbers = #tpu.dot_dimension_numbers<[2], [1], [1], [2], [0, 0, 0, 1, 1, 2], [0], [0]>} : vector<2x8x8xbf16>, vector<2x8x8xbf16>, vector<2x8x8xf32> -> vector<2x8x8xf32>
    "tpu.trace_stop"() : () -> ()
    %66 = vector.extract_strided_slice %36 {offsets = [0, 0, 8], sizes = [2, 8, 8], strides = [1, 1, 1]} : vector<2x8x32xbf16> to vector<2x8x8xbf16>
    %67 = vector.extract_strided_slice %39 {offsets = [0, 0, 8], sizes = [2, 8, 8], strides = [1, 1, 1]} : vector<2x8x32xbf16> to vector<2x8x8xbf16>
    %68 = vector.extract_strided_slice %42 {offsets = [0, 0, 8], sizes = [2, 8, 8], strides = [1, 1, 1]} : vector<2x8x32xbf16> to vector<2x8x8xbf16>
    "tpu.trace_start"() <{level = 10 : i32, message = "btd,bsd->bts"}> : () -> ()
    %cst_21 = arith.constant dense<0.000000e+00> : vector<2x8x8xf32>
    %69 = tpu.matmul %66, %67, %cst_21 {dimension_numbers = #tpu.dot_dimension_numbers<[2], [2], [1], [1], [0, 0, 0, 1, 1, 1], [0], [0]>} : vector<2x8x8xbf16>, vector<2x8x8xbf16>, vector<2x8x8xf32> -> vector<2x8x8xf32>
    %cst_22 = arith.constant -1.000000e+30 : f32
    "tpu.trace_stop"() : () -> ()
    %70 = vector.shape_cast %45 : vector<8x8xi1> to vector<1x8x8xi1>
    %71 = vector.broadcast %70 : vector<1x8x8xi1> to vector<2x8x8xi1>
    %72 = vector.broadcast %cst_22 : f32 to vector<2x8x8xf32>
    %73 = arith.select %71, %72, %69 : vector<2x8x8xi1>, vector<2x8x8xf32>
    %cst_23 = arith.constant dense<0xFF800000> : vector<2x8xf32>
    %74 = vector.multi_reduction <maximumf>, %73, %cst_23 [2] : vector<2x8x8xf32> to vector<2x8xf32>
    %75 = vector.shape_cast %74 : vector<2x8xf32> to vector<2x8x1xf32>
    %76 = vector.broadcast %75 : vector<2x8x1xf32> to vector<2x8x8xf32>
    %77 = arith.subf %73, %76 : vector<2x8x8xf32>
    %78 = math.exp %77 : vector<2x8x8xf32>
    %cst_24 = arith.constant dense<0.000000e+00> : vector<2x8xf32>
    %79 = vector.multi_reduction <add>, %78, %cst_24 [2] : vector<2x8x8xf32> to vector<2x8xf32>
    %80 = vector.shape_cast %79 : vector<2x8xf32> to vector<2x8x1xf32>
    %81 = tpu.reciprocal %80 {approx = true} : vector<2x8x1xf32> -> vector<2x8x1xf32>
    %82 = vector.broadcast %81 : vector<2x8x1xf32> to vector<2x8x8xf32>
    %83 = arith.mulf %78, %82 : vector<2x8x8xf32>
    %84 = arith.truncf %83 : vector<2x8x8xf32> to vector<2x8x8xbf16>
    "tpu.trace_start"() <{level = 10 : i32, message = "bts,bsd->btd"}> : () -> ()
    %cst_25 = arith.constant dense<0.000000e+00> : vector<2x8x8xf32>
    %85 = tpu.matmul %84, %68, %cst_25 {dimension_numbers = #tpu.dot_dimension_numbers<[2], [1], [1], [2], [0, 0, 0, 1, 1, 2], [0], [0]>} : vector<2x8x8xbf16>, vector<2x8x8xbf16>, vector<2x8x8xf32> -> vector<2x8x8xf32>
    "tpu.trace_stop"() : () -> ()
    %86 = vector.extract_strided_slice %36 {offsets = [0, 0, 16], sizes = [2, 8, 8], strides = [1, 1, 1]} : vector<2x8x32xbf16> to vector<2x8x8xbf16>
    %87 = vector.extract_strided_slice %39 {offsets = [0, 0, 16], sizes = [2, 8, 8], strides = [1, 1, 1]} : vector<2x8x32xbf16> to vector<2x8x8xbf16>
    %88 = vector.extract_strided_slice %42 {offsets = [0, 0, 16], sizes = [2, 8, 8], strides = [1, 1, 1]} : vector<2x8x32xbf16> to vector<2x8x8xbf16>
    "tpu.trace_start"() <{level = 10 : i32, message = "btd,bsd->bts"}> : () -> ()
    %cst_26 = arith.constant dense<0.000000e+00> : vector<2x8x8xf32>
    %89 = tpu.matmul %86, %87, %cst_26 {dimension_numbers = #tpu.dot_dimension_numbers<[2], [2], [1], [1], [0, 0, 0, 1, 1, 1], [0], [0]>} : vector<2x8x8xbf16>, vector<2x8x8xbf16>, vector<2x8x8xf32> -> vector<2x8x8xf32>
    %cst_27 = arith.constant -1.000000e+30 : f32
    "tpu.trace_stop"() : () -> ()
    %90 = vector.shape_cast %45 : vector<8x8xi1> to vector<1x8x8xi1>
    %91 = vector.broadcast %90 : vector<1x8x8xi1> to vector<2x8x8xi1>
    %92 = vector.broadcast %cst_27 : f32 to vector<2x8x8xf32>
    %93 = arith.select %91, %92, %89 : vector<2x8x8xi1>, vector<2x8x8xf32>
    %cst_28 = arith.constant dense<0xFF800000> : vector<2x8xf32>
    %94 = vector.multi_reduction <maximumf>, %93, %cst_28 [2] : vector<2x8x8xf32> to vector<2x8xf32>
    %95 = vector.shape_cast %94 : vector<2x8xf32> to vector<2x8x1xf32>
    %96 = vector.broadcast %95 : vector<2x8x1xf32> to vector<2x8x8xf32>
    %97 = arith.subf %93, %96 : vector<2x8x8xf32>
    %98 = math.exp %97 : vector<2x8x8xf32>
    %cst_29 = arith.constant dense<0.000000e+00> : vector<2x8xf32>
    %99 = vector.multi_reduction <add>, %98, %cst_29 [2] : vector<2x8x8xf32> to vector<2x8xf32>
    %100 = vector.shape_cast %99 : vector<2x8xf32> to vector<2x8x1xf32>
    %101 = tpu.reciprocal %100 {approx = true} : vector<2x8x1xf32> -> vector<2x8x1xf32>
    %102 = vector.broadcast %101 : vector<2x8x1xf32> to vector<2x8x8xf32>
    %103 = arith.mulf %98, %102 : vector<2x8x8xf32>
    %104 = arith.truncf %103 : vector<2x8x8xf32> to vector<2x8x8xbf16>
    "tpu.trace_start"() <{level = 10 : i32, message = "bts,bsd->btd"}> : () -> ()
    %cst_30 = arith.constant dense<0.000000e+00> : vector<2x8x8xf32>
    %105 = tpu.matmul %104, %88, %cst_30 {dimension_numbers = #tpu.dot_dimension_numbers<[2], [1], [1], [2], [0, 0, 0, 1, 1, 2], [0], [0]>} : vector<2x8x8xbf16>, vector<2x8x8xbf16>, vector<2x8x8xf32> -> vector<2x8x8xf32>
    "tpu.trace_stop"() : () -> ()
    %106 = vector.extract_strided_slice %36 {offsets = [0, 0, 24], sizes = [2, 8, 8], strides = [1, 1, 1]} : vector<2x8x32xbf16> to vector<2x8x8xbf16>
    %107 = vector.extract_strided_slice %39 {offsets = [0, 0, 24], sizes = [2, 8, 8], strides = [1, 1, 1]} : vector<2x8x32xbf16> to vector<2x8x8xbf16>
    %108 = vector.extract_strided_slice %42 {offsets = [0, 0, 24], sizes = [2, 8, 8], strides = [1, 1, 1]} : vector<2x8x32xbf16> to vector<2x8x8xbf16>
    "tpu.trace_start"() <{level = 10 : i32, message = "btd,bsd->bts"}> : () -> ()
    %cst_31 = arith.constant dense<0.000000e+00> : vector<2x8x8xf32>
    %109 = tpu.matmul %106, %107, %cst_31 {dimension_numbers = #tpu.dot_dimension_numbers<[2], [2], [1], [1], [0, 0, 0, 1, 1, 1], [0], [0]>} : vector<2x8x8xbf16>, vector<2x8x8xbf16>, vector<2x8x8xf32> -> vector<2x8x8xf32>
    %cst_32 = arith.constant -1.000000e+30 : f32
    "tpu.trace_stop"() : () -> ()
    %110 = vector.shape_cast %45 : vector<8x8xi1> to vector<1x8x8xi1>
    %111 = vector.broadcast %110 : vector<1x8x8xi1> to vector<2x8x8xi1>
    %112 = vector.broadcast %cst_32 : f32 to vector<2x8x8xf32>
    %113 = arith.select %111, %112, %109 : vector<2x8x8xi1>, vector<2x8x8xf32>
    %cst_33 = arith.constant dense<0xFF800000> : vector<2x8xf32>
    %114 = vector.multi_reduction <maximumf>, %113, %cst_33 [2] : vector<2x8x8xf32> to vector<2x8xf32>
    %115 = vector.shape_cast %114 : vector<2x8xf32> to vector<2x8x1xf32>
    %116 = vector.broadcast %115 : vector<2x8x1xf32> to vector<2x8x8xf32>
    %117 = arith.subf %113, %116 : vector<2x8x8xf32>
    %118 = math.exp %117 : vector<2x8x8xf32>
    %cst_34 = arith.constant dense<0.000000e+00> : vector<2x8xf32>
    %119 = vector.multi_reduction <add>, %118, %cst_34 [2] : vector<2x8x8xf32> to vector<2x8xf32>
    %120 = vector.shape_cast %119 : vector<2x8xf32> to vector<2x8x1xf32>
    %121 = tpu.reciprocal %120 {approx = true} : vector<2x8x1xf32> -> vector<2x8x1xf32>
    %122 = vector.broadcast %121 : vector<2x8x1xf32> to vector<2x8x8xf32>
    %123 = arith.mulf %118, %122 : vector<2x8x8xf32>
    %124 = arith.truncf %123 : vector<2x8x8xf32> to vector<2x8x8xbf16>
    "tpu.trace_start"() <{level = 10 : i32, message = "bts,bsd->btd"}> : () -> ()
    %cst_35 = arith.constant dense<0.000000e+00> : vector<2x8x8xf32>
    %125 = tpu.matmul %124, %108, %cst_35 {dimension_numbers = #tpu.dot_dimension_numbers<[2], [1], [1], [2], [0, 0, 0, 1, 1, 2], [0], [0]>} : vector<2x8x8xbf16>, vector<2x8x8xbf16>, vector<2x8x8xf32> -> vector<2x8x8xf32>
    "tpu.trace_stop"() : () -> ()
    %126 = tpu.concatenate %65, %85, %105, %125 in 2 : vector<2x8x8xf32>, vector<2x8x8xf32>, vector<2x8x8xf32>, vector<2x8x8xf32> -> vector<2x8x32xf32>
    %127 = vector.shape_cast %126 : vector<2x8x32xf32> to vector<16x32xf32>
    %c0_36 = arith.constant 0 : index
    %c0_37 = arith.constant 0 : index
    %128 = vector.load %arg6[%c0_36, %c0_37] : memref<32x32xbf16, #tpu.memory_space<vmem>>, vector<32x32xbf16>
    %129 = arith.truncf %127 : vector<16x32xf32> to vector<16x32xbf16>
    %cst_38 = arith.constant dense<0.000000e+00> : vector<16x32xf32>
    %130 = tpu.matmul %129, %128, %cst_38 {dimension_numbers = #tpu.dot_dimension_numbers<[1], [0], [0], [1], [0, 0, 1, 1], [], []>} : vector<16x32xbf16>, vector<32x32xbf16>, vector<16x32xf32> -> vector<16x32xf32>
    %131 = arith.addf %1, %130 : vector<16x32xf32>
    %c0_39 = arith.constant 0 : index
    %c0_40 = arith.constant 0 : index
    %132 = vector.load %arg7[%c0_39, %c0_40] : memref<1x32xf32, #tpu.memory_space<vmem>>, vector<1x32xf32>
    %133 = vector.broadcast %132 : vector<1x32xf32> to vector<16x32xf32>
    %134 = arith.addf %131, %133 : vector<16x32xf32>
    %c0_41 = arith.constant 0 : index
    %c0_42 = arith.constant 0 : index
    %135 = vector.load %arg8[%c0_41, %c0_42] : memref<1x32xf32, #tpu.memory_space<vmem>>, vector<1x32xf32>
    %c0_43 = arith.constant 0 : index
    %c0_44 = arith.constant 0 : index
    %136 = vector.load %arg9[%c0_43, %c0_44] : memref<1x32xf32, #tpu.memory_space<vmem>>, vector<1x32xf32>
    %cst_45 = arith.constant dense<0.000000e+00> : vector<16xf32>
    %137 = vector.multi_reduction <add>, %134, %cst_45 [1] : vector<16x32xf32> to vector<16xf32>
    %138 = vector.shape_cast %137 : vector<16xf32> to vector<16x1xf32>
    %cst_46 = arith.constant 3.200000e+01 : f32
    %139 = vector.broadcast %cst_46 : f32 to vector<16x1xf32>
    %140 = arith.divf %138, %139 : vector<16x1xf32>
    %141 = vector.broadcast %140 : vector<16x1xf32> to vector<16x32xf32>
    %142 = arith.subf %134, %141 : vector<16x32xf32>
    %143 = arith.mulf %142, %142 : vector<16x32xf32>
    %cst_47 = arith.constant dense<0.000000e+00> : vector<16xf32>
    %144 = vector.multi_reduction <add>, %143, %cst_47 [1] : vector<16x32xf32> to vector<16xf32>
    %145 = vector.shape_cast %144 : vector<16xf32> to vector<16x1xf32>
    %cst_48 = arith.constant 3.200000e+01 : f32
    %146 = vector.broadcast %cst_48 : f32 to vector<16x1xf32>
    %147 = arith.divf %145, %146 : vector<16x1xf32>
    %148 = vector.broadcast %140 : vector<16x1xf32> to vector<16x32xf32>
    %149 = arith.subf %134, %148 : vector<16x32xf32>
    %cst_49 = arith.constant 9.99999974E-6 : f32
    %150 = vector.broadcast %cst_49 : f32 to vector<16x1xf32>
    %151 = arith.addf %147, %150 : vector<16x1xf32>
    %152 = math.rsqrt %151 : vector<16x1xf32>
    %153 = vector.broadcast %152 : vector<16x1xf32> to vector<16x32xf32>
    %154 = arith.mulf %149, %153 : vector<16x32xf32>
    %155 = vector.broadcast %135 : vector<1x32xf32> to vector<16x32xf32>
    %156 = arith.mulf %154, %155 : vector<16x32xf32>
    %157 = vector.broadcast %136 : vector<1x32xf32> to vector<16x32xf32>
    %158 = arith.addf %156, %157 : vector<16x32xf32>
    %c0_50 = arith.constant 0 : index
    %c0_51 = arith.constant 0 : index
    %159 = vector.load %arg10[%c0_50, %c0_51] : memref<32x128xbf16, #tpu.memory_space<vmem>>, vector<32x128xbf16>
    %160 = arith.truncf %158 : vector<16x32xf32> to vector<16x32xbf16>
    %cst_52 = arith.constant dense<0.000000e+00> : vector<16x128xf32>
    %161 = tpu.matmul %160, %159, %cst_52 {dimension_numbers = #tpu.dot_dimension_numbers<[1], [0], [0], [1], [0, 0, 1, 1], [], []>} : vector<16x32xbf16>, vector<32x128xbf16>, vector<16x128xf32> -> vector<16x128xf32>
    %c0_53 = arith.constant 0 : index
    %c0_54 = arith.constant 0 : index
    %162 = vector.load %arg11[%c0_53, %c0_54] : memref<1x128xf32, #tpu.memory_space<vmem>>, vector<1x128xf32>
    %163 = vector.broadcast %162 : vector<1x128xf32> to vector<16x128xf32>
    %164 = arith.addf %161, %163 : vector<16x128xf32>
    %cst_55 = arith.constant 1.702000e+00 : f32
    %165 = vector.broadcast %cst_55 : f32 to vector<16x128xf32>
    %166 = arith.mulf %165, %164 : vector<16x128xf32>
    %167 = arith.negf %166 : vector<16x128xf32>
    %168 = math.exp %167 : vector<16x128xf32>
    %cst_56 = arith.constant 1.000000e+00 : f32
    %169 = vector.broadcast %cst_56 : f32 to vector<16x128xf32>
    %170 = arith.addf %169, %168 : vector<16x128xf32>
    %171 = arith.divf %169, %170 : vector<16x128xf32>
    %172 = arith.mulf %164, %171 : vector<16x128xf32>
    %c0_57 = arith.constant 0 : index
    %c0_58 = arith.constant 0 : index
    %173 = vector.load %arg12[%c0_57, %c0_58] : memref<128x32xbf16, #tpu.memory_space<vmem>>, vector<128x32xbf16>
    %174 = arith.truncf %172 : vector<16x128xf32> to vector<16x128xbf16>
    %cst_59 = arith.constant dense<0.000000e+00> : vector<16x32xf32>
    %175 = tpu.matmul %174, %173, %cst_59 {dimension_numbers = #tpu.dot_dimension_numbers<[1], [0], [0], [1], [0, 0, 1, 1], [], []>} : vector<16x128xbf16>, vector<128x32xbf16>, vector<16x32xf32> -> vector<16x32xf32>
    %c0_60 = arith.constant 0 : index
    %c0_61 = arith.constant 0 : index
    %176 = vector.load %arg13[%c0_60, %c0_61] : memref<1x32xf32, #tpu.memory_space<vmem>>, vector<1x32xf32>
    %177 = vector.broadcast %176 : vector<1x32xf32> to vector<16x32xf32>
    %178 = arith.addf %175, %177 : vector<16x32xf32>
    %179 = arith.addf %134, %178 : vector<16x32xf32>
    %180 = vector.shape_cast %179 : vector<16x32xf32> to vector<2x8x32xf32>
    %c0_62 = arith.constant 0 : index
    %c0_63 = arith.constant 0 : index
    %c0_64 = arith.constant 0 : index
    %181 = vector.load %arg16[%c0_62, %c0_63, %c0_64] : memref<2x8x32xf32, #tpu.memory_space<vmem>>, vector<2x8x32xf32>
    tpu.vector_store %arg16[%c0_62, %c0_63, %c0_64], %180 {strides = array<i32>} : memref<2x8x32xf32, #tpu.memory_space<vmem>>, vector<2x8x32xf32>,
    return
  }
  func.func @transform_0(%arg0: i32) -> (i32, i32, i32) {
    %c0_i32 = arith.constant 0 : i32
    %c0_i32_0 = arith.constant 0 : i32
    %c0_i32_1 = arith.constant 0 : i32
    return %arg0, %c0_i32, %c0_i32_0 : i32, i32, i32
  }
  func.func @transform_1(%arg0: i32) -> (i32, i32) {
    %c0_i32 = arith.constant 0 : i32
    %c0_i32_0 = arith.constant 0 : i32
    %c0_i32_1 = arith.constant 0 : i32
    return %c0_i32, %c0_i32_0 : i32, i32
  }
  func.func @transform_2(%arg0: i32) -> (i32, i32) {
    %c0_i32 = arith.constant 0 : i32
    %c0_i32_0 = arith.constant 0 : i32
    %c0_i32_1 = arith.constant 0 : i32
    return %c0_i32, %c0_i32_0 : i32, i32
  }
  func.func @transform_3(%arg0: i32) -> (i32, i32) {
    %c0_i32 = arith.constant 0 : i32
    %c0_i32_0 = arith.constant 0 : i32
    %c0_i32_1 = arith.constant 0 : i32
    return %c0_i32, %c0_i32_0 : i32, i32
  }
  func.func @transform_4(%arg0: i32) -> (i32, i32) {
    %c0_i32 = arith.constant 0 : i32
    %c0_i32_0 = arith.constant 0 : i32
    %c0_i32_1 = arith.constant 0 : i32
    return %c0_i32, %c0_i32_0 : i32, i32
  }
  func.func @transform_5(%arg0: i32) -> (i32, i32) {
    %c0_i32 = arith.constant 0 : i32
    %c0_i32_0 = arith.constant 0 : i32
    %c0_i32_1 = arith.constant 0 : i32
    return %c0_i32, %c0_i32_0 : i32, i32
  }
  func.func @transform_6(%arg0: i32) -> (i32, i32) {
    %c0_i32 = arith.constant 0 : i32
    %c0_i32_0 = arith.constant 0 : i32
    %c0_i32_1 = arith.constant 0 : i32
    return %c0_i32, %c0_i32_0 : i32, i32
  }
  func.func @transform_7(%arg0: i32) -> (i32, i32) {
    %c0_i32 = arith.constant 0 : i32
    %c0_i32_0 = arith.constant 0 : i32
    %c0_i32_1 = arith.constant 0 : i32
    return %c0_i32, %c0_i32_0 : i32, i32
  }
  func.func @transform_8(%arg0: i32) -> (i32, i32) {
    %c0_i32 = arith.constant 0 : i32
    %c0_i32_0 = arith.constant 0 : i32
    %c0_i32_1 = arith.constant 0 : i32
    return %c0_i32, %c0_i32_0 : i32, i32
  }
  func.func @transform_9(%arg0: i32) -> (i32, i32) {
    %c0_i32 = arith.constant 0 : i32
    %c0_i32_0 = arith.constant 0 : i32
    %c0_i32_1 = arith.constant 0 : i32
    return %c0_i32, %c0_i32_0 : i32, i32
  }
  func.func @transform_10(%arg0: i32) -> (i32, i32) {
    %c0_i32 = arith.constant 0 : i32
    %c0_i32_0 = arith.constant 0 : i32
    %c0_i32_1 = arith.constant 0 : i32
    return %c0_i32, %c0_i32_0 : i32, i32
  }
  func.func @transform_11(%arg0: i32) -> (i32, i32) {
    %c0_i32 = arith.constant 0 : i32
    %c0_i32_0 = arith.constant 0 : i32
    %c0_i32_1 = arith.constant 0 : i32
    return %c0_i32, %c0_i32_0 : i32, i32
  }
  func.func @transform_12(%arg0: i32) -> (i32, i32) {
    %c0_i32 = arith.constant 0 : i32
    %c0_i32_0 = arith.constant 0 : i32
    %c0_i32_1 = arith.constant 0 : i32
    return %c0_i32, %c0_i32_0 : i32, i32
  }
  func.func @transform_13(%arg0: i32) -> (i32, i32) {
    %c0_i32 = arith.constant 0 : i32
    %c0_i32_0 = arith.constant 0 : i32
    %c0_i32_1 = arith.constant 0 : i32
    return %c0_i32, %c0_i32_0 : i32, i32
  }
  func.func @transform_14(%arg0: i32) -> (i32, i32) {
    %c0_i32 = arith.constant 0 : i32
    %c0_i32_0 = arith.constant 0 : i32
    %c0_i32_1 = arith.constant 0 : i32
    return %c0_i32, %c0_i32_0 : i32, i32
  }
  func.func @transform_15(%arg0: i32) -> (i32, i32, i32) {
    %c0_i32 = arith.constant 0 : i32
    %c0_i32_0 = arith.constant 0 : i32
    %c0_i32_1 = arith.constant 0 : i32
    return %arg0, %c0_i32, %c0_i32_0 : i32, i32, i32
  }
}

</mosaic_0001>

<llo_original>
// kernel: tpu_custom_call.1
$region0: #{tpu_custom_call.1}
  #allocation0 [shape = 'u32[]', space=smem, size = 0x4, offset = 0x4, fixed_abs, tag = 'smem constant byte address 0x4 - core index']
  #allocation1 [shape = 'u32[72,128]{1,0:T(1,128)}', space=vmem, size = 0x9000, scoped, tag = 'internal scratch']
  %s0 = inlined_call_operand.vmem [shape: f32[2,8,32], index: 0, kind: input, shape index: {}]
  %s1 = inlined_call_operand.vmem [shape: f32[1,32], index: 1, kind: input, shape index: {}]
  %s2 = inlined_call_operand.vmem [shape: f32[1,32], index: 2, kind: input, shape index: {}]
  %s3 = inlined_call_operand.vmem [shape: bf16[32,96], index: 3, kind: input, shape index: {}]
  %s4 = inlined_call_operand.vmem [shape: f32[1,96], index: 4, kind: input, shape index: {}]
  %s5 = inlined_call_operand.vmem [shape: bf16[32,32], index: 5, kind: input, shape index: {}]
  %s6 = inlined_call_operand.vmem [shape: f32[1,32], index: 6, kind: input, shape index: {}]
  %s7 = inlined_call_operand.vmem [shape: f32[1,32], index: 7, kind: input, shape index: {}]
  %s8 = inlined_call_operand.vmem [shape: f32[1,32], index: 8, kind: input, shape index: {}]
  %s9 = inlined_call_operand.vmem [shape: bf16[32,128], index: 9, kind: input, shape index: {}]
  %s10 = inlined_call_operand.vmem [shape: f32[1,128], index: 10, kind: input, shape index: {}]
  %s11 = inlined_call_operand.vmem [shape: bf16[128,32], index: 11, kind: input, shape index: {}]
  %s12 = inlined_call_operand.vmem [shape: f32[1,32], index: 12, kind: input, shape index: {}]
  %s13 = inlined_call_operand.vmem [shape: f32[1,32], index: 13, kind: input, shape index: {}]
  %s14 = inlined_call_operand.vmem [shape: f32[1,32], index: 14, kind: input, shape index: {}]
  %s15 = inlined_call_operand.hbm [shape: f32[2,8,32], index: 15, kind: output, shape index: {}]
  %s16 = sld [smem:[#allocation0]]
  $region70: #{tpu_custom_call.1} parent=0
    _
  %s18 = ssub.s32 1, %s16
  %s19 = scalar_select 0, %s18, %s16
  $region1: #{tpu_custom_call.1} parent=0
    #allocation2 [shape = 'u8[8192]{0}', space=vmem, size = 0x2000, scoped, tag = 'output window, operand 0, single buffered']
    #allocation3 [shape = 's32[1]{0}', space=sflag, size = 0x4, scoped, tag = 'scoped memory for tpu_custom_call.1']
    %20 = vsyncpa [#allocation3], 0
    // Predicated region
    $region2: #{tpu_custom_call.1} parent=1 // pred_check
      _
    $region3: #{tpu_custom_call.1} parent=1 // pred_check_branch
      %22 = sbr.rel (0) target = $region5
    $region4: #{tpu_custom_call.1} parent=1 // pred_region
      _
    $region5: #{tpu_custom_call.1} parent=1 // pred_fallthru
      _
    // Predicated region
    $region6: #{tpu_custom_call.1} parent=1 // pred_check
      _
    $region7: #{tpu_custom_call.1} parent=1 // pred_check_branch
      %24 = sbr.rel (0) target = $region9
    $region8: #{tpu_custom_call.1} parent=1 // pred_region
      _
    $region9: #{tpu_custom_call.1} parent=1 // pred_fallthru
      _
    // Predicated region
    $region10: #{tpu_custom_call.1} parent=1 // pred_check
      _
    $region11: #{tpu_custom_call.1} parent=1 // pred_check_branch
      %26 = sbr.rel (0) target = $region13
    $region12: #{tpu_custom_call.1} parent=1 // pred_region
      _
    $region13: #{tpu_custom_call.1} parent=1 // pred_fallthru
      _
    // Predicated region
    $region14: #{tpu_custom_call.1} parent=1 // pred_check
      _
    $region15: #{tpu_custom_call.1} parent=1 // pred_check_branch
      %28 = sbr.rel (0) target = $region17
    $region16: #{tpu_custom_call.1} parent=1 // pred_region
      _
    $region17: #{tpu_custom_call.1} parent=1 // pred_fallthru
      _
    // Predicated region
    $region18: #{tpu_custom_call.1} parent=1 // pred_check
      _
    $region19: #{tpu_custom_call.1} parent=1 // pred_check_branch
      %30 = sbr.rel (0) target = $region21
    $region20: #{tpu_custom_call.1} parent=1 // pred_region
      _
    $region21: #{tpu_custom_call.1} parent=1 // pred_fallthru
      _
    // Predicated region
    $region22: #{tpu_custom_call.1} parent=1 // pred_check
      _
    $region23: #{tpu_custom_call.1} parent=1 // pred_check_branch
      %32 = sbr.rel (0) target = $region25
    $region24: #{tpu_custom_call.1} parent=1 // pred_region
      _
    $region25: #{tpu_custom_call.1} parent=1 // pred_fallthru
      _
    // Predicated region
    $region26: #{tpu_custom_call.1} parent=1 // pred_check
      _
    $region27: #{tpu_custom_call.1} parent=1 // pred_check_branch
      %34 = sbr.rel (0) target = $region29
    $region28: #{tpu_custom_call.1} parent=1 // pred_region
      _
    $region29: #{tpu_custom_call.1} parent=1 // pred_fallthru
      _
    // Predicated region
    $region30: #{tpu_custom_call.1} parent=1 // pred_check
      _
    $region31: #{tpu_custom_call.1} parent=1 // pred_check_branch
      %36 = sbr.rel (0) target = $region33
    $region32: #{tpu_custom_call.1} parent=1 // pred_region
      _
    $region33: #{tpu_custom_call.1} parent=1 // pred_fallthru
      _
    // Predicated region
    $region34: #{tpu_custom_call.1} parent=1 // pred_check
      _
    $region35: #{tpu_custom_call.1} parent=1 // pred_check_branch
      %38 = sbr.rel (0) target = $region37
    $region36: #{tpu_custom_call.1} parent=1 // pred_region
      _
    $region37: #{tpu_custom_call.1} parent=1 // pred_fallthru
      _
    // Predicated region
    $region38: #{tpu_custom_call.1} parent=1 // pred_check
      _
    $region39: #{tpu_custom_call.1} parent=1 // pred_check_branch
      %40 = sbr.rel (0) target = $region41
    $region40: #{tpu_custom_call.1} parent=1 // pred_region
      _
    $region41: #{tpu_custom_call.1} parent=1 // pred_fallthru
      _
    // Predicated region
    $region42: #{tpu_custom_call.1} parent=1 // pred_check
      _
    $region43: #{tpu_custom_call.1} parent=1 // pred_check_branch
      %42 = sbr.rel (0) target = $region45
    $region44: #{tpu_custom_call.1} parent=1 // pred_region
      _
    $region45: #{tpu_custom_call.1} parent=1 // pred_fallthru
      _
    // Predicated region
    $region46: #{tpu_custom_call.1} parent=1 // pred_check
      _
    $region47: #{tpu_custom_call.1} parent=1 // pred_check_branch
      %44 = sbr.rel (0) target = $region49
    $region48: #{tpu_custom_call.1} parent=1 // pred_region
      _
    $region49: #{tpu_custom_call.1} parent=1 // pred_fallthru
      _
    // Predicated region
    $region50: #{tpu_custom_call.1} parent=1 // pred_check
      _
    $region51: #{tpu_custom_call.1} parent=1 // pred_check_branch
      %46 = sbr.rel (0) target = $region53
    $region52: #{tpu_custom_call.1} parent=1 // pred_region
      _
    $region53: #{tpu_custom_call.1} parent=1 // pred_fallthru
      _
    // Predicated region
    $region54: #{tpu_custom_call.1} parent=1 // pred_check
      _
    $region55: #{tpu_custom_call.1} parent=1 // pred_check_branch
      %48 = sbr.rel (0) target = $region57
    $region56: #{tpu_custom_call.1} parent=1 // pred_region
      _
    $region57: #{tpu_custom_call.1} parent=1 // pred_fallthru
      _
    // Predicated region
    $region58: #{tpu_custom_call.1} parent=1 // pred_check
      _
    $region59: #{tpu_custom_call.1} parent=1 // pred_check_branch
      %50 = sbr.rel (0) target = $region61
    $region60: #{tpu_custom_call.1} parent=1 // pred_region
      _
    $region61: #{tpu_custom_call.1} parent=1 // pred_fallthru
      _
    %v52 = vld [vmem:[%s0] sm:$0xff]
    %v53 = vld [vmem:[%s0 + $0x8] sm:$0xff]
    %v54 = vld [vmem:[%s1] sm:$0x1]
    %v55 = vld [vmem:[%s2] sm:$0x1]
    %vm56 = vcmask 261120
    %v57 = vsel %vm56, %v52, 0.0
    %58 = vadd.xlane.f32.xlu0 %v57
    %v59 = vpop.xlane.xlu0 %58
    %v60 = vsel %vm56, %v53, 0.0
    %61 = vadd.xlane.f32.xlu0 %v60
    %v62 = vpop.xlane.xlu0 %61
    %v63 = vrcp.pop 32.0
    %v64 = vmul.f32 32.0, %v63
    %v65 = vsub.f32 1.0, %v64
    %v66 = vmul.f32 %v63, %v65
    %v67 = vadd.f32 %v63, %v66
    %vm68 = vweird.f32 %v63
    %v69 = vsel %vm68, %v63, %v67
    %v70 = vmul.f32 %v59, %v69
    %v71 = vmul.f32 %v62, %v69
    %v72 = vsub.f32 %v52, %v70
    %v73 = vsub.f32 %v53, %v71
    %v74 = vmul.f32 %v72, %v72
    %v75 = vmul.f32 %v73, %v73
    %v76 = vsel %vm56, %v74, 0.0
    %77 = vadd.xlane.f32.xlu0 %v76
    %v78 = vpop.xlane.xlu0 %77
    %v79 = vsel %vm56, %v75, 0.0
    %80 = vadd.xlane.f32.xlu0 %v79
    %v81 = vpop.xlane.xlu0 %80
    %v82 = vmul.f32 %v78, %v69
    %v83 = vmul.f32 %v81, %v69
    %v84 = vadd.f32 %v82, 1e-05
    %v85 = vadd.f32 %v83, 1e-05
    %v86 = vrsqrt.pop %v84
    %v87 = vmul.f32 %v86, %v84
    %v88 = vmul.f32 %v87, %v86
    %v89 = vmul.f32 0.5, %v88
    %v90 = vsub.f32 1.5, %v89
    %v91 = vmul.f32 %v86, %v90
    %vm92 = vweird.f32 %v84
    %vm93 = vweird.f32 %v86
    %vm94 = vmor %vm92, %vm93
    %v95 = vsel %vm94, %v86, %v91
    %v96 = vrsqrt.pop %v85
    %v97 = vmul.f32 %v96, %v85
    %v98 = vmul.f32 %v97, %v96
    %v99 = vmul.f32 0.5, %v98
    %v100 = vsub.f32 1.5, %v99
    %v101 = vmul.f32 %v96, %v100
    %vm102 = vweird.f32 %v85
    %vm103 = vweird.f32 %v96
    %vm104 = vmor %vm102, %vm103
    %v105 = vsel %vm104, %v96, %v101
    %v106 = vmul.f32 %v72, %v95
    %v107 = vmul.f32 %v73, %v105
    %v109 = vperm.slane %v54, 0
    %v111 = vmul.f32 %v106, %v109
    %v112 = vmul.f32 %v107, %v109
    %v114 = vperm.slane %v55, 0
    %v116 = vadd.f32 %v111, %v114
    %v117 = vadd.f32 %v112, %v114
    %v118 = vld [vmem:[%s3] sm:$0xf]
    %v119 = vld [vmem:[%s3 + $0x4] sm:$0xf]
    %v120 = vld [vmem:[%s3 + $0x8] sm:$0xf]
    %v121 = vld [vmem:[%s3 + $0xc] sm:$0xf]
    %v122 = vpack.c.bf16 %v117, %v116
    %v123 = vld [vmem:[%s4] sm:$0x1]
    %v125 = vperm.slane %v123, 0
    %v131 = vunpack.c.l.b16 %v118
    %v132 = vunpack.c.l.b16 %v119
    %v133 = vunpack.c.l.b16 %v120
    %v134 = vunpack.c.l.b16 %v121
    %v135 = vpack.c.b16 %v132, %v131
    %v136 = vpack.c.b16 %v134, %v133
    %v140 = vsel %vm56, %v122, 0
    %142 = vmatpush.bf16.msra.mxu0 0
    %143 = vmatpush.bf16.msra.mxu0 0
    %144 = vmatpush.bf16.msra.mxu0 0
    %145 = vmatpush.bf16.msra.mxu0 0
    %146 = vmatpush.bf16.msra.mxu0 0
    %147 = vmatpush.bf16.msra.mxu0 0
    %148 = vmatpush.bf16.msra.mxu0 %v136
    %149 = vmatpush.bf16.msra.mxu0 %v135
    %150 = vmatmul.bf16.gmra.mxu0 %v140
    %v151 = vpop.f32.mrf.mxu0
    %v152 = vadd.f32 %v125, %v151
    %v153 = vpop.f32.mrf.mxu0
    %v154 = vadd.f32 %v125, %v153
    %155 = vdwg.mxu0
    %v156 = vmul.f32 %v152, 0.35355338
    %v157 = vmul.f32 %v154, 0.35355338
    %v158 = vpack.c.bf16 %v156, %v156
    %v159 = vpack.c.bf16 %v157, %v157
    %v160 = vpack.c.bf16 %v152, %v152
    %v161 = vpack.c.bf16 %v154, %v154
    %v162 = vlaneseq
    %v163 = vshrl.u32 %v162, 7
    %v164 = vlaneseq
    %v165 = vand.u32 %v164, 127
    %vm166 = vcmp.gt.s32.totalorder %v165, %v163
    %v168 = vunpack.c.l.b16 %v160
    %v169 = vpack.c.b16 %v168, %v168
    %170 = vrot.lane.b32.xlu0 %v169, 96
    %v171 = vpop.permute.xlu0 %170
    %vm172 = vcmask 64512
    %v174 = vsel %vm172, %v158, 0
    %v177 = vsel %vm172, %v171, 0
    %179 = vmatpush.bf16.xpose.msra.mxu0 0
    %180 = vmatpush.bf16.xpose.msra.mxu0 0
    %181 = vmatpush.bf16.xpose.msra.mxu0 0
    %182 = vmatpush.bf16.xpose.msra.mxu0 0
    %183 = vmatpush.bf16.xpose.msra.mxu0 0
    %184 = vmatpush.bf16.xpose.msra.mxu0 0
    %185 = vmatpush.bf16.xpose.msra.mxu0 0
    %186 = vmatpush.bf16.xpose.msra.mxu0 %v177
    %187 = vmatmul.bf16.gmra.mxu0 %v174
    %v188 = vpop.f32.mrf.mxu0
    %v189 = vadd.f32 0.0, %v188
    %v190 = vpop.f32.mrf.mxu0
    %191 = vdwg.mxu0
    %v193 = vunpack.c.l.b16 %v161
    %v194 = vpack.c.b16 %v193, %v193
    %195 = vrot.lane.b32.xlu0 %v194, 96
    %v196 = vpop.permute.xlu0 %195
    %v198 = vsel %vm172, %v159, 0
    %v201 = vsel %vm172, %v196, 0
    %203 = vmatpush.bf16.xpose.msra.mxu0 0
    %204 = vmatpush.bf16.xpose.msra.mxu0 0
    %205 = vmatpush.bf16.xpose.msra.mxu0 0
    %206 = vmatpush.bf16.xpose.msra.mxu0 0
    %207 = vmatpush.bf16.xpose.msra.mxu0 0
    %208 = vmatpush.bf16.xpose.msra.mxu0 0
    %209 = vmatpush.bf16.xpose.msra.mxu0 0
    %210 = vmatpush.bf16.xpose.msra.mxu0 %v201
    %211 = vmatmul.bf16.gmra.mxu0 %v198
    %v212 = vpop.f32.mrf.mxu0
    %v213 = vadd.f32 0.0, %v212
    %v214 = vpop.f32.mrf.mxu0
    %215 = vdwg.mxu0
    %v216 = vsel %vm166, 1, 0
    %vm217 = vcmp.eq.s32.totalorder %v216, 1
    %v218 = vsel %vm217, -1e+30, %v189
    %v219 = vsel %vm217, -1e+30, %v213
    %v220 = vsel %vm172, %v218, -inf
    %221 = vmax.xlane.f32.xlu0 %v220
    %v222 = vpop.xlane.xlu0 %221
    %v223 = vsel %vm172, %v219, -inf
    %224 = vmax.xlane.f32.xlu0 %v223
    %v225 = vpop.xlane.xlu0 %224
    %v226 = vsub.f32 %v218, %v222
    %v227 = vsub.f32 %v219, %v225
    %v228 = vmul.f32 %v226, 1.442695
    %v229 = vpow.pop %v228
    %v230 = vmul.f32 %v227, 1.442695
    %v231 = vpow.pop %v230
    %v232 = vsel %vm172, %v229, 0.0
    %233 = vadd.xlane.f32.xlu0 %v232
    %v234 = vpop.xlane.xlu0 %233
    %v235 = vsel %vm172, %v231, 0.0
    %236 = vadd.xlane.f32.xlu0 %v235
    %v237 = vpop.xlane.xlu0 %236
    %v238 = vrcp.pop %v234
    %v239 = vrcp.pop %v237
    %v240 = vmul.f32 %v229, %v238
    %v241 = vmul.f32 %v231, %v239
    %v242 = vpack.c.bf16 %v240, %v240
    %v243 = vpack.c.bf16 %v241, %v241
    %244 = vrot.lane.b32.xlu0 %v169, 64
    %v245 = vpop.permute.xlu0 %244
    %v247 = vsel %vm172, %v242, 0
    %vm249 = vcmask 1043456
    %v251 = vsel %vm249, %v245, 0
    %253 = vmatpush.bf16.msra.mxu0 0
    %254 = vmatpush.bf16.msra.mxu0 0
    %255 = vmatpush.bf16.msra.mxu0 0
    %256 = vmatpush.bf16.msra.mxu0 0
    %257 = vmatpush.bf16.msra.mxu0 0
    %258 = vmatpush.bf16.msra.mxu0 0
    %259 = vmatpush.bf16.msra.mxu0 0
    %260 = vmatpush.bf16.msra.mxu0 %v251
    %261 = vmatmul.bf16.gmra.mxu0 %v247
    %v262 = vpop.f32.mrf.mxu0
    %v263 = vadd.f32 0.0, %v262
    %v264 = vpop.f32.mrf.mxu0
    %265 = vdwg.mxu0
    %266 = vrot.lane.b32.xlu0 %v194, 64
    %v267 = vpop.permute.xlu0 %266
    %v269 = vsel %vm172, %v243, 0
    %v272 = vsel %vm249, %v267, 0
    %274 = vmatpush.bf16.msra.mxu0 0
    %275 = vmatpush.bf16.msra.mxu0 0
    %276 = vmatpush.bf16.msra.mxu0 0
    %277 = vmatpush.bf16.msra.mxu0 0
    %278 = vmatpush.bf16.msra.mxu0 0
    %279 = vmatpush.bf16.msra.mxu0 0
    %280 = vmatpush.bf16.msra.mxu0 0
    %281 = vmatpush.bf16.msra.mxu0 %v272
    %282 = vmatmul.bf16.gmra.mxu0 %v269
    %v283 = vpop.f32.mrf.mxu0
    %v284 = vadd.f32 0.0, %v283
    %v285 = vpop.f32.mrf.mxu0
    %286 = vdwg.mxu0
    %v288 = vunpack.c.l.b16 %v158
    %v289 = vpack.c.b16 %v288, %v288
    %290 = vrot.lane.b32.xlu0 %v289, 120
    %v291 = vpop.permute.xlu0 %290
    %292 = vrot.lane.b32.xlu0 %v169, 88
    %v293 = vpop.permute.xlu0 %292
    %v295 = vsel %vm172, %v291, 0
    %v298 = vsel %vm172, %v293, 0
    %300 = vmatpush.bf16.xpose.msra.mxu0 0
    %301 = vmatpush.bf16.xpose.msra.mxu0 0
    %302 = vmatpush.bf16.xpose.msra.mxu0 0
    %303 = vmatpush.bf16.xpose.msra.mxu0 0
    %304 = vmatpush.bf16.xpose.msra.mxu0 0
    %305 = vmatpush.bf16.xpose.msra.mxu0 0
    %306 = vmatpush.bf16.xpose.msra.mxu0 0
    %307 = vmatpush.bf16.xpose.msra.mxu0 %v298
    %308 = vmatmul.bf16.gmra.mxu0 %v295
    %v309 = vpop.f32.mrf.mxu0
    %v310 = vadd.f32 0.0, %v309
    %v311 = vpop.f32.mrf.mxu0
    %312 = vdwg.mxu0
    %v314 = vunpack.c.l.b16 %v159
    %v315 = vpack.c.b16 %v314, %v314
    %316 = vrot.lane.b32.xlu0 %v315, 120
    %v317 = vpop.permute.xlu0 %316
    %318 = vrot.lane.b32.xlu0 %v194, 88
    %v319 = vpop.permute.xlu0 %318
    %v321 = vsel %vm172, %v317, 0
    %v324 = vsel %vm172, %v319, 0
    %326 = vmatpush.bf16.xpose.msra.mxu0 0
    %327 = vmatpush.bf16.xpose.msra.mxu0 0
    %328 = vmatpush.bf16.xpose.msra.mxu0 0
    %329 = vmatpush.bf16.xpose.msra.mxu0 0
    %330 = vmatpush.bf16.xpose.msra.mxu0 0
    %331 = vmatpush.bf16.xpose.msra.mxu0 0
    %332 = vmatpush.bf16.xpose.msra.mxu0 0
    %333 = vmatpush.bf16.xpose.msra.mxu0 %v324
    %334 = vmatmul.bf16.gmra.mxu0 %v321
    %v335 = vpop.f32.mrf.mxu0
    %v336 = vadd.f32 0.0, %v335
    %v337 = vpop.f32.mrf.mxu0
    %338 = vdwg.mxu0
    %v339 = vsel %vm217, -1e+30, %v310
    %v340 = vsel %vm217, -1e+30, %v336
    %v341 = vsel %vm172, %v339, -inf
    %342 = vmax.xlane.f32.xlu0 %v341
    %v343 = vpop.xlane.xlu0 %342
    %v344 = vsel %vm172, %v340, -inf
    %345 = vmax.xlane.f32.xlu0 %v344
    %v346 = vpop.xlane.xlu0 %345
    %v347 = vsub.f32 %v339, %v343
    %v348 = vsub.f32 %v340, %v346
    %v349 = vmul.f32 %v347, 1.442695
    %v350 = vpow.pop %v349
    %v351 = vmul.f32 %v348, 1.442695
    %v352 = vpow.pop %v351
    %v353 = vsel %vm172, %v350, 0.0
    %354 = vadd.xlane.f32.xlu0 %v353
    %v355 = vpop.xlane.xlu0 %354
    %v356 = vsel %vm172, %v352, 0.0
    %357 = vadd.xlane.f32.xlu0 %v356
    %v358 = vpop.xlane.xlu0 %357
    %v359 = vrcp.pop %v355
    %v360 = vrcp.pop %v358
    %v361 = vmul.f32 %v350, %v359
    %v362 = vmul.f32 %v352, %v360
    %v363 = vpack.c.bf16 %v361, %v361
    %v364 = vpack.c.bf16 %v362, %v362
    %365 = vrot.lane.b32.xlu0 %v169, 56
    %v366 = vpop.permute.xlu0 %365
    %v368 = vsel %vm172, %v363, 0
    %v371 = vsel %vm249, %v366, 0
    %373 = vmatpush.bf16.msra.mxu0 0
    %374 = vmatpush.bf16.msra.mxu0 0
    %375 = vmatpush.bf16.msra.mxu0 0
    %376 = vmatpush.bf16.msra.mxu0 0
    %377 = vmatpush.bf16.msra.mxu0 0
    %378 = vmatpush.bf16.msra.mxu0 0
    %379 = vmatpush.bf16.msra.mxu0 0
    %380 = vmatpush.bf16.msra.mxu0 %v371
    %381 = vmatmul.bf16.gmra.mxu0 %v368
    %v382 = vpop.f32.mrf.mxu0
    %v383 = vadd.f32 0.0, %v382
    %v384 = vpop.f32.mrf.mxu0
    %385 = vdwg.mxu0
    %386 = vrot.lane.b32.xlu0 %v194, 56
    %v387 = vpop.permute.xlu0 %386
    %v389 = vsel %vm172, %v364, 0
    %v392 = vsel %vm249, %v387, 0
    %394 = vmatpush.bf16.msra.mxu0 0
    %395 = vmatpush.bf16.msra.mxu0 0
    %396 = vmatpush.bf16.msra.mxu0 0
    %397 = vmatpush.bf16.msra.mxu0 0
    %398 = vmatpush.bf16.msra.mxu0 0
    %399 = vmatpush.bf16.msra.mxu0 0
    %400 = vmatpush.bf16.msra.mxu0 0
    %401 = vmatpush.bf16.msra.mxu0 %v392
    %402 = vmatmul.bf16.gmra.mxu0 %v389
    %v403 = vpop.f32.mrf.mxu0
    %v404 = vadd.f32 0.0, %v403
    %v405 = vpop.f32.mrf.mxu0
    %406 = vdwg.mxu0
    %407 = vrot.lane.b32.xlu0 %v289, 112
    %v408 = vpop.permute.xlu0 %407
    %409 = vrot.lane.b32.xlu0 %v169, 80
    %v410 = vpop.permute.xlu0 %409
    %v412 = vsel %vm172, %v408, 0
    %v415 = vsel %vm172, %v410, 0
    %417 = vmatpush.bf16.xpose.msra.mxu0 0
    %418 = vmatpush.bf16.xpose.msra.mxu0 0
    %419 = vmatpush.bf16.xpose.msra.mxu0 0
    %420 = vmatpush.bf16.xpose.msra.mxu0 0
    %421 = vmatpush.bf16.xpose.msra.mxu0 0
    %422 = vmatpush.bf16.xpose.msra.mxu0 0
    %423 = vmatpush.bf16.xpose.msra.mxu0 0
    %424 = vmatpush.bf16.xpose.msra.mxu0 %v415
    %425 = vmatmul.bf16.gmra.mxu0 %v412
    %v426 = vpop.f32.mrf.mxu0
    %v427 = vadd.f32 0.0, %v426
    %v428 = vpop.f32.mrf.mxu0
    %429 = vdwg.mxu0
    %430 = vrot.lane.b32.xlu0 %v315, 112
    %v431 = vpop.permute.xlu0 %430
    %432 = vrot.lane.b32.xlu0 %v194, 80
    %v433 = vpop.permute.xlu0 %432
    %v435 = vsel %vm172, %v431, 0
    %v438 = vsel %vm172, %v433, 0
    %440 = vmatpush.bf16.xpose.msra.mxu0 0
    %441 = vmatpush.bf16.xpose.msra.mxu0 0
    %442 = vmatpush.bf16.xpose.msra.mxu0 0
    %443 = vmatpush.bf16.xpose.msra.mxu0 0
    %444 = vmatpush.bf16.xpose.msra.mxu0 0
    %445 = vmatpush.bf16.xpose.msra.mxu0 0
    %446 = vmatpush.bf16.xpose.msra.mxu0 0
    %447 = vmatpush.bf16.xpose.msra.mxu0 %v438
    %448 = vmatmul.bf16.gmra.mxu0 %v435
    %v449 = vpop.f32.mrf.mxu0
    %v450 = vadd.f32 0.0, %v449
    %v451 = vpop.f32.mrf.mxu0
    %452 = vdwg.mxu0
    %v453 = vsel %vm217, -1e+30, %v427
    %v454 = vsel %vm217, -1e+30, %v450
    %v455 = vsel %vm172, %v453, -inf
    %456 = vmax.xlane.f32.xlu0 %v455
    %v457 = vpop.xlane.xlu0 %456
    %v458 = vsel %vm172, %v454, -inf
    %459 = vmax.xlane.f32.xlu0 %v458
    %v460 = vpop.xlane.xlu0 %459
    %v461 = vsub.f32 %v453, %v457
    %v462 = vsub.f32 %v454, %v460
    %v463 = vmul.f32 %v461, 1.442695
    %v464 = vpow.pop %v463
    %v465 = vmul.f32 %v462, 1.442695
    %v466 = vpow.pop %v465
    %v467 = vsel %vm172, %v464, 0.0
    %468 = vadd.xlane.f32.xlu0 %v467
    %v469 = vpop.xlane.xlu0 %468
    %v470 = vsel %vm172, %v466, 0.0
    %471 = vadd.xlane.f32.xlu0 %v470
    %v472 = vpop.xlane.xlu0 %471
    %v473 = vrcp.pop %v469
    %v474 = vrcp.pop %v472
    %v475 = vmul.f32 %v464, %v473
    %v476 = vmul.f32 %v466, %v474
    %v477 = vpack.c.bf16 %v475, %v475
    %v478 = vpack.c.bf16 %v476, %v476
    %479 = vrot.lane.b32.xlu0 %v169, 48
    %v480 = vpop.permute.xlu0 %479
    %v482 = vsel %vm172, %v477, 0
    %v485 = vsel %vm249, %v480, 0
    %487 = vmatpush.bf16.msra.mxu0 0
    %488 = vmatpush.bf16.msra.mxu0 0
    %489 = vmatpush.bf16.msra.mxu0 0
    %490 = vmatpush.bf16.msra.mxu0 0
    %491 = vmatpush.bf16.msra.mxu0 0
    %492 = vmatpush.bf16.msra.mxu0 0
    %493 = vmatpush.bf16.msra.mxu0 0
    %494 = vmatpush.bf16.msra.mxu0 %v485
    %495 = vmatmul.bf16.gmra.mxu0 %v482
    %v496 = vpop.f32.mrf.mxu0
    %v497 = vadd.f32 0.0, %v496
    %v498 = vpop.f32.mrf.mxu0
    %499 = vdwg.mxu0
    %500 = vrot.lane.b32.xlu0 %v194, 48
    %v501 = vpop.permute.xlu0 %500
    %v503 = vsel %vm172, %v478, 0
    %v506 = vsel %vm249, %v501, 0
    %508 = vmatpush.bf16.msra.mxu0 0
    %509 = vmatpush.bf16.msra.mxu0 0
    %510 = vmatpush.bf16.msra.mxu0 0
    %511 = vmatpush.bf16.msra.mxu0 0
    %512 = vmatpush.bf16.msra.mxu0 0
    %513 = vmatpush.bf16.msra.mxu0 0
    %514 = vmatpush.bf16.msra.mxu0 0
    %515 = vmatpush.bf16.msra.mxu0 %v506
    %516 = vmatmul.bf16.gmra.mxu0 %v503
    %v517 = vpop.f32.mrf.mxu0
    %v518 = vadd.f32 0.0, %v517
    %v519 = vpop.f32.mrf.mxu0
    %520 = vdwg.mxu0
    %521 = vrot.lane.b32.xlu0 %v289, 104
    %v522 = vpop.permute.xlu0 %521
    %523 = vrot.lane.b32.xlu0 %v169, 72
    %v524 = vpop.permute.xlu0 %523
    %v526 = vsel %vm172, %v522, 0
    %v529 = vsel %vm172, %v524, 0
    %531 = vmatpush.bf16.xpose.msra.mxu0 0
    %532 = vmatpush.bf16.xpose.msra.mxu0 0
    %533 = vmatpush.bf16.xpose.msra.mxu0 0
    %534 = vmatpush.bf16.xpose.msra.mxu0 0
    %535 = vmatpush.bf16.xpose.msra.mxu0 0
    %536 = vmatpush.bf16.xpose.msra.mxu0 0
    %537 = vmatpush.bf16.xpose.msra.mxu0 0
    %538 = vmatpush.bf16.xpose.msra.mxu0 %v529
    %539 = vmatmul.bf16.gmra.mxu0 %v526
    %v540 = vpop.f32.mrf.mxu0
    %v541 = vadd.f32 0.0, %v540
    %v542 = vpop.f32.mrf.mxu0
    %543 = vdwg.mxu0
    %544 = vrot.lane.b32.xlu0 %v315, 104
    %v545 = vpop.permute.xlu0 %544
    %546 = vrot.lane.b32.xlu0 %v194, 72
    %v547 = vpop.permute.xlu0 %546
    %v549 = vsel %vm172, %v545, 0
    %v552 = vsel %vm172, %v547, 0
    %554 = vmatpush.bf16.xpose.msra.mxu0 0
    %555 = vmatpush.bf16.xpose.msra.mxu0 0
    %556 = vmatpush.bf16.xpose.msra.mxu0 0
    %557 = vmatpush.bf16.xpose.msra.mxu0 0
    %558 = vmatpush.bf16.xpose.msra.mxu0 0
    %559 = vmatpush.bf16.xpose.msra.mxu0 0
    %560 = vmatpush.bf16.xpose.msra.mxu0 0
    %561 = vmatpush.bf16.xpose.msra.mxu0 %v552
    %562 = vmatmul.bf16.gmra.mxu0 %v549
    %v563 = vpop.f32.mrf.mxu0
    %v564 = vadd.f32 0.0, %v563
    %v565 = vpop.f32.mrf.mxu0
    %566 = vdwg.mxu0
    %v567 = vsel %vm217, -1e+30, %v541
    %v568 = vsel %vm217, -1e+30, %v564
    %v569 = vsel %vm172, %v567, -inf
    %570 = vmax.xlane.f32.xlu0 %v569
    %v571 = vpop.xlane.xlu0 %570
    %v572 = vsel %vm172, %v568, -inf
    %573 = vmax.xlane.f32.xlu0 %v572
    %v574 = vpop.xlane.xlu0 %573
    %v575 = vsub.f32 %v567, %v571
    %v576 = vsub.f32 %v568, %v574
    %v577 = vmul.f32 %v575, 1.442695
    %v578 = vpow.pop %v577
    %v579 = vmul.f32 %v576, 1.442695
    %v580 = vpow.pop %v579
    %v581 = vsel %vm172, %v578, 0.0
    %582 = vadd.xlane.f32.xlu0 %v581
    %v583 = vpop.xlane.xlu0 %582
    %v584 = vsel %vm172, %v580, 0.0
    %585 = vadd.xlane.f32.xlu0 %v584
    %v586 = vpop.xlane.xlu0 %585
    %v587 = vrcp.pop %v583
    %v588 = vrcp.pop %v586
    %v589 = vmul.f32 %v578, %v587
    %v590 = vmul.f32 %v580, %v588
    %v591 = vpack.c.bf16 %v589, %v589
    %v592 = vpack.c.bf16 %v590, %v590
    %593 = vrot.lane.b32.xlu0 %v169, 40
    %v594 = vpop.permute.xlu0 %593
    %v596 = vsel %vm172, %v591, 0
    %v599 = vsel %vm249, %v594, 0
    %601 = vmatpush.bf16.msra.mxu0 0
    %602 = vmatpush.bf16.msra.mxu0 0
    %603 = vmatpush.bf16.msra.mxu0 0
    %604 = vmatpush.bf16.msra.mxu0 0
    %605 = vmatpush.bf16.msra.mxu0 0
    %606 = vmatpush.bf16.msra.mxu0 0
    %607 = vmatpush.bf16.msra.mxu0 0
    %608 = vmatpush.bf16.msra.mxu0 %v599
    %609 = vmatmul.bf16.gmra.mxu0 %v596
    %v610 = vpop.f32.mrf.mxu0
    %v611 = vadd.f32 0.0, %v610
    %v612 = vpop.f32.mrf.mxu0
    %613 = vdwg.mxu0
    %614 = vrot.lane.b32.xlu0 %v194, 40
    %v615 = vpop.permute.xlu0 %614
    %v617 = vsel %vm172, %v592, 0
    %v620 = vsel %vm249, %v615, 0
    %622 = vmatpush.bf16.msra.mxu0 0
    %623 = vmatpush.bf16.msra.mxu0 0
    %624 = vmatpush.bf16.msra.mxu0 0
    %625 = vmatpush.bf16.msra.mxu0 0
    %626 = vmatpush.bf16.msra.mxu0 0
    %627 = vmatpush.bf16.msra.mxu0 0
    %628 = vmatpush.bf16.msra.mxu0 0
    %629 = vmatpush.bf16.msra.mxu0 %v620
    %630 = vmatmul.bf16.gmra.mxu0 %v617
    %v631 = vpop.f32.mrf.mxu0
    %v632 = vadd.f32 0.0, %v631
    %v633 = vpop.f32.mrf.mxu0
    %634 = vdwg.mxu0
    %637 = vrot.lane.b32.xlu0 %v383, 8
    %v638 = vpop.permute.xlu0 %637
    %639 = vrot.lane.b32.xlu0 %v404, 8
    %v640 = vpop.permute.xlu0 %639
    %645 = vrot.lane.b32.xlu0 %v497, 16
    %v646 = vpop.permute.xlu0 %645
    %647 = vrot.lane.b32.xlu0 %v518, 16
    %v648 = vpop.permute.xlu0 %647
    %653 = vrot.lane.b32.xlu0 %v611, 24
    %v654 = vpop.permute.xlu0 %653
    %655 = vrot.lane.b32.xlu0 %v632, 24
    %v656 = vpop.permute.xlu0 %655
    %v659 = vsel %vm172, %v263, %v638
    %v660 = vsel %vm172, %v284, %v640
    %vm661 = vcmask 130048
    %v662 = vsel %vm661, %v659, %v646
    %v663 = vsel %vm661, %v660, %v648
    %vm664 = vcmask 195584
    %v665 = vsel %vm664, %v662, %v654
    %v666 = vsel %vm664, %v663, %v656
    %v667 = vld [vmem:[%s5] sm:$0xf]
    %v668 = vld [vmem:[%s5 + $0x4] sm:$0xf]
    %v669 = vld [vmem:[%s5 + $0x8] sm:$0xf]
    %v670 = vld [vmem:[%s5 + $0xc] sm:$0xf]
    %v671 = vpack.c.bf16 %v666, %v665
    %v676 = vunpack.c.l.b16 %v667
    %v677 = vunpack.c.l.b16 %v668
    %v678 = vunpack.c.l.b16 %v669
    %v679 = vunpack.c.l.b16 %v670
    %v680 = vpack.c.b16 %v677, %v676
    %v681 = vpack.c.b16 %v679, %v678
    %v685 = vsel %vm56, %v671, 0
    %687 = vmatpush.bf16.msra.mxu0 0
    %688 = vmatpush.bf16.msra.mxu0 0
    %689 = vmatpush.bf16.msra.mxu0 0
    %690 = vmatpush.bf16.msra.mxu0 0
    %691 = vmatpush.bf16.msra.mxu0 0
    %692 = vmatpush.bf16.msra.mxu0 0
    %693 = vmatpush.bf16.msra.mxu0 %v681
    %694 = vmatpush.bf16.msra.mxu0 %v680
    %695 = vmatmul.bf16.gmra.mxu0 %v685
    %v696 = vpop.f32.mrf.mxu0
    %v697 = vadd.f32 0.0, %v696
    %v698 = vpop.f32.mrf.mxu0
    %v699 = vadd.f32 0.0, %v698
    %700 = vdwg.mxu0
    %v701 = vadd.f32 %v52, %v697
    %v702 = vadd.f32 %v53, %v699
    %v703 = vld [vmem:[%s6] sm:$0x1]
    %v705 = vperm.slane %v703, 0
    %v707 = vadd.f32 %v701, %v705
    %v708 = vadd.f32 %v702, %v705
    %v709 = vld [vmem:[%s7] sm:$0x1]
    %v710 = vld [vmem:[%s8] sm:$0x1]
    %v711 = vsel %vm56, %v707, 0.0
    %712 = vadd.xlane.f32.xlu0 %v711
    %v713 = vpop.xlane.xlu0 %712
    %v714 = vsel %vm56, %v708, 0.0
    %715 = vadd.xlane.f32.xlu0 %v714
    %v716 = vpop.xlane.xlu0 %715
    %v717 = vmul.f32 %v713, %v69
    %v718 = vmul.f32 %v716, %v69
    %v719 = vsub.f32 %v707, %v717
    %v720 = vsub.f32 %v708, %v718
    %v721 = vmul.f32 %v719, %v719
    %v722 = vmul.f32 %v720, %v720
    %v723 = vsel %vm56, %v721, 0.0
    %724 = vadd.xlane.f32.xlu0 %v723
    %v725 = vpop.xlane.xlu0 %724
    %v726 = vsel %vm56, %v722, 0.0
    %727 = vadd.xlane.f32.xlu0 %v726
    %v728 = vpop.xlane.xlu0 %727
    %v729 = vmul.f32 %v725, %v69
    %v730 = vmul.f32 %v728, %v69
    %v731 = vadd.f32 %v729, 1e-05
    %v732 = vadd.f32 %v730, 1e-05
    %v733 = vrsqrt.pop %v731
    %v734 = vmul.f32 %v733, %v731
    %v735 = vmul.f32 %v734, %v733
    %v736 = vmul.f32 0.5, %v735
    %v737 = vsub.f32 1.5, %v736
    %v738 = vmul.f32 %v733, %v737
    %vm739 = vweird.f32 %v731
    %vm740 = vweird.f32 %v733
    %vm741 = vmor %vm739, %vm740
    %v742 = vsel %vm741, %v733, %v738
    %v743 = vrsqrt.pop %v732
    %v744 = vmul.f32 %v743, %v732
    %v745 = vmul.f32 %v744, %v743
    %v746 = vmul.f32 0.5, %v745
    %v747 = vsub.f32 1.5, %v746
    %v748 = vmul.f32 %v743, %v747
    %vm749 = vweird.f32 %v732
    %vm750 = vweird.f32 %v743
    %vm751 = vmor %vm749, %vm750
    %v752 = vsel %vm751, %v743, %v748
    %v753 = vmul.f32 %v719, %v742
    %v754 = vmul.f32 %v720, %v752
    %v756 = vperm.slane %v709, 0
    %v758 = vmul.f32 %v753, %v756
    %v759 = vmul.f32 %v754, %v756
    %v761 = vperm.slane %v710, 0
    %v763 = vadd.f32 %v758, %v761
    %v764 = vadd.f32 %v759, %v761
    %v765 = vld [vmem:[%s9] sm:$0xf]
    %v766 = vld [vmem:[%s9 + $0x4] sm:$0xf]
    %v767 = vld [vmem:[%s9 + $0x8] sm:$0xf]
    %v768 = vld [vmem:[%s9 + $0xc] sm:$0xf]
    %v769 = vpack.c.bf16 %v764, %v763
    %v770 = vld [vmem:[%s10] sm:$0x1]
    %v772 = vperm.slane %v770, 0
    %v778 = vunpack.c.l.b16 %v765
    %v779 = vunpack.c.l.b16 %v766
    %v780 = vunpack.c.l.b16 %v767
    %v781 = vunpack.c.l.b16 %v768
    %v782 = vpack.c.b16 %v779, %v778
    %v783 = vpack.c.b16 %v781, %v780
    %v787 = vsel %vm56, %v769, 0
    %789 = vmatpush.bf16.msra.mxu0 0
    %790 = vmatpush.bf16.msra.mxu0 0
    %791 = vmatpush.bf16.msra.mxu0 0
    %792 = vmatpush.bf16.msra.mxu0 0
    %793 = vmatpush.bf16.msra.mxu0 0
    %794 = vmatpush.bf16.msra.mxu0 0
    %795 = vmatpush.bf16.msra.mxu0 %v783
    %796 = vmatpush.bf16.msra.mxu0 %v782
    %797 = vmatmul.bf16.gmra.mxu0 %v787
    %v798 = vpop.f32.mrf.mxu0
    %v799 = vadd.f32 %v772, %v798
    %v800 = vpop.f32.mrf.mxu0
    %v801 = vadd.f32 %v772, %v800
    %802 = vdwg.mxu0
    %v803 = vmul.f32 %v799, 1.702
    %v804 = vmul.f32 %v801, 1.702
    %v805 = vxor.u32 %v803, 2147483648
    %v806 = vxor.u32 %v804, 2147483648
    %v807 = vmul.f32 %v805, 1.442695
    %v808 = vpow.pop %v807
    %v809 = vmul.f32 %v806, 1.442695
    %v810 = vpow.pop %v809
    %v811 = vadd.f32 %v808, 1.0
    %v812 = vadd.f32 %v810, 1.0
    %v813 = vrcp.pop %v811
    %v814 = vmul.f32 %v811, %v813
    %v815 = vsub.f32 1.0, %v814
    %v816 = vmul.f32 %v813, %v815
    %v817 = vadd.f32 %v813, %v816
    %vm818 = vweird.f32 %v811
    %vm819 = vweird.f32 %v813
    %vm820 = vmor %vm818, %vm819
    %v821 = vsel %vm820, %v813, %v817
    %v822 = vand.u32 2147483647, %v811
    %vm823 = vcmp.eq.f32.partialorder %v822, 8.507059e+37
    %v824 = vand.u32 %v811, 2147483648
    %v825 = vor.u32 1.1754944e-38, %v824
    %v826 = vsel %vm823, %v825, %v821
    %v827 = vmul.f32 1.0, %v826
    %v828 = vrcp.pop %v812
    %v829 = vmul.f32 %v812, %v828
    %v830 = vsub.f32 1.0, %v829
    %v831 = vmul.f32 %v828, %v830
    %v832 = vadd.f32 %v828, %v831
    %vm833 = vweird.f32 %v812
    %vm834 = vweird.f32 %v828
    %vm835 = vmor %vm833, %vm834
    %v836 = vsel %vm835, %v828, %v832
    %v837 = vand.u32 2147483647, %v812
    %vm838 = vcmp.eq.f32.partialorder %v837, 8.507059e+37
    %v839 = vand.u32 %v812, 2147483648
    %v840 = vor.u32 1.1754944e-38, %v839
    %v841 = vsel %vm838, %v840, %v836
    %v842 = vmul.f32 1.0, %v841
    %v843 = vmul.f32 %v799, %v827
    %v844 = vmul.f32 %v801, %v842
    %v845 = vld [vmem:[%s11] sm:$0xf]
    %v846 = vld [vmem:[%s11 + $0x4] sm:$0xf]
    %v847 = vld [vmem:[%s11 + $0x8] sm:$0xf]
    %v848 = vld [vmem:[%s11 + $0xc] sm:$0xf]
    %v849 = vld [vmem:[%s11 + $0x10] sm:$0xf]
    %v850 = vld [vmem:[%s11 + $0x14] sm:$0xf]
    %v851 = vld [vmem:[%s11 + $0x18] sm:$0xf]
    %v852 = vld [vmem:[%s11 + $0x1c] sm:$0xf]
    %v853 = vld [vmem:[%s11 + $0x20] sm:$0xf]
    %v854 = vld [vmem:[%s11 + $0x24] sm:$0xf]
    %v855 = vld [vmem:[%s11 + $0x28] sm:$0xf]
    %v856 = vld [vmem:[%s11 + $0x2c] sm:$0xf]
    %v857 = vld [vmem:[%s11 + $0x30] sm:$0xf]
    %v858 = vld [vmem:[%s11 + $0x34] sm:$0xf]
    %v859 = vld [vmem:[%s11 + $0x38] sm:$0xf]
    %v860 = vld [vmem:[%s11 + $0x3c] sm:$0xf]
    %v861 = vpack.c.bf16 %v844, %v843
    %v862 = vld [vmem:[%s12] sm:$0x1]
    %v864 = vperm.slane %v862, 0
    %v882 = vunpack.c.l.b16 %v845
    %v883 = vunpack.c.l.b16 %v846
    %v884 = vunpack.c.l.b16 %v847
    %v885 = vunpack.c.l.b16 %v848
    %v886 = vunpack.c.l.b16 %v849
    %v887 = vunpack.c.l.b16 %v850
    %v888 = vunpack.c.l.b16 %v851
    %v889 = vunpack.c.l.b16 %v852
    %v890 = vunpack.c.l.b16 %v853
    %v891 = vunpack.c.l.b16 %v854
    %v892 = vunpack.c.l.b16 %v855
    %v893 = vunpack.c.l.b16 %v856
    %v894 = vunpack.c.l.b16 %v857
    %v895 = vunpack.c.l.b16 %v858
    %v896 = vunpack.c.l.b16 %v859
    %v897 = vunpack.c.l.b16 %v860
    %v898 = vpack.c.b16 %v883, %v882
    %v899 = vpack.c.b16 %v885, %v884
    %v900 = vpack.c.b16 %v887, %v886
    %v901 = vpack.c.b16 %v889, %v888
    %v902 = vpack.c.b16 %v891, %v890
    %v903 = vpack.c.b16 %v893, %v892
    %v904 = vpack.c.b16 %v895, %v894
    %v905 = vpack.c.b16 %v897, %v896
    %914 = vmatpush.bf16.msra.mxu0 %v905
    %915 = vmatpush.bf16.msra.mxu0 %v904
    %916 = vmatpush.bf16.msra.mxu0 %v903
    %917 = vmatpush.bf16.msra.mxu0 %v902
    %918 = vmatpush.bf16.msra.mxu0 %v901
    %919 = vmatpush.bf16.msra.mxu0 %v900
    %920 = vmatpush.bf16.msra.mxu0 %v899
    %921 = vmatpush.bf16.msra.mxu0 %v898
    %922 = vmatmul.bf16.gmra.mxu0 %v861
    %v923 = vpop.f32.mrf.mxu0
    %v924 = vadd.f32 %v864, %v923
    %v925 = vpop.f32.mrf.mxu0
    %v926 = vadd.f32 %v864, %v925
    %927 = vdwg.mxu0
    %v928 = vadd.f32 %v707, %v924
    %v929 = vadd.f32 %v708, %v926
    %930 = vst.msk [vmem:[#allocation2] sm:$0xff] %vm56, %v928
    %931 = vst.msk [vmem:[#allocation2 + $0x8] sm:$0xff] %vm56, %v929
    // Predicated region
    $region62: #{tpu_custom_call.1} parent=1 // pred_check
      _
    $region63: #{tpu_custom_call.1} parent=1 // pred_check_branch
      %933 = sbr.rel (0) target = $region65
    $region64: #{tpu_custom_call.1} parent=1 // pred_region
      %935 = vsyncadd [#allocation3], 0
      %s936 = sshll.u32 [#allocation2], 4
      %s937 = int_to_ptr.vmem [resolvable:$true] %s936
      %s938 = sshll.u32 %s15, 4
      %s939 = int_to_ptr.hbm [resolvable:$true] %s938
      %944 = dma.vmem_to_hbm [thread:$0]  %s937, 256, %s939, [#allocation3], 128, 128, 8
    $region65: #{tpu_custom_call.1} parent=1 // pred_fallthru
      _
    // Predicated region
    $region66: #{tpu_custom_call.1} parent=1 // pred_check
      _
    $region67: #{tpu_custom_call.1} parent=1 // pred_check_branch
      %946 = sbr.rel (0) target = $region69
    $region68: #{tpu_custom_call.1} parent=1 // pred_region
      %948 = dma.done [#allocation3], 256
    $region69: #{tpu_custom_call.1} parent=1 // pred_fallthru
      _
    %949 = vsyncpa [#allocation3], 1

</llo_original>
